<compile_context>
chip_gen: v7x
topology: tpu7x:2x2x1
jax: 0.10.0
libtpu: 0.0.40
codegen_flags: <defaults>
</compile_context>

<pallas_src>
import functools

import jax
import jax.numpy as jnp
from jax import lax
from jax.experimental import pallas as pl
from jax.experimental.pallas import tpu as pltpu

EPS = 1e-5  # PyTorch GroupNorm default eps


def _silu(v):
    return v * jax.nn.sigmoid(v)


def _round_up(v, m):
    return -(-v // m) * m


def resblock_kernel(x_ref, emb_ref, masks_ref, wa_ref, wb_ref, o_ref, *,
                    H, W, nb, C, Cout, E):
    HW = H * W
    NC = nb * C
    NCo = nb * Cout

    # --- static slab offsets (must match the wrapper packing) ---
    K1 = 9 * NC                      # conv1 block-diag im2col width
    K2 = 9 * NCo + NC                # conv2 + fused 1x1 skip width
    K1p = _round_up(K1, 128)
    K2p = _round_up(K2, 128)
    o_w2 = K1p
    o_we = K1p + K2p
    o_agg2 = o_we + E
    o_vec = o_agg2 + NCo

    # slab A (NCo rows): [W1_bd |pad| W2S_bd |pad| we_rep | agg2 | vecs x4]
    w1 = wa_ref[:, 0:K1]                       # (NCo, 9*NC)
    w2s = wa_ref[:, o_w2:o_w2 + K2]            # (NCo, 9*NCo + NC)
    we = wa_ref[:, o_we:o_we + E]              # (NCo, E)
    agg2 = wa_ref[:, o_agg2:o_agg2 + NCo]      # (NCo, NCo)
    bias1 = wa_ref[:, o_vec + 0:o_vec + 1]     # conv1 bias + emb-linear bias
    g2 = wa_ref[:, o_vec + 1:o_vec + 2]
    b2 = wa_ref[:, o_vec + 2:o_vec + 3]
    bias2 = wa_ref[:, o_vec + 3:o_vec + 4]     # conv2 bias + skip-conv bias

    # slab B (NC rows): [gamma1 | beta1 | agg1]
    g1 = wb_ref[:, 0:1]
    b1 = wb_ref[:, 1:2]
    agg1 = wb_ref[:, 2:2 + NC]

    masks = masks_ref[...]                     # (8, HW) f32 {0,1}

    def conv_cols(h, extra=None):
        """im2col rows for a stacked (R, HW) tile via masked lane rolls.

        Each row of `h` is a single image's channel, so per-row lane rolls are
        exactly the per-image 3x3 tap shifts; boundary masks zero the wraps."""
        cols = []
        mi = 0
        for dy in (-1, 0, 1):
            for dx in (-1, 0, 1):
                off = dy * W + dx
                if off == 0:
                    cols.append(h)
                else:
                    sh = pltpu.roll(h, (-off) % HW, axis=1)
                    cols.append(sh * masks[mi:mi + 1, :])
                    mi += 1
        if extra is not None:                  # fused 1x1 skip rows
            cols.append(extra)
        return jnp.concatenate(cols, axis=0)

    def group_norm(v, gamma, beta, agg):
        """GroupNorm on a batch-stacked (R, HW) tile.

        agg is block-diagonal per image: agg[i,j] = 1/(cpg*HW) iff rows i,j
        belong to the same image AND the same group."""
        s = jnp.sum(v, axis=-1, keepdims=True)
        ss = jnp.sum(v * v, axis=-1, keepdims=True)
        g = jnp.dot(agg, jnp.concatenate([s, ss], axis=-1),
                    preferred_element_type=jnp.float32)       # (R, 2)
        mean = g[:, 0:1]
        var = jnp.maximum(g[:, 1:2] - mean * mean, 0.0)
        return (v - mean) * lax.rsqrt(var + EPS) * gamma + beta

    x = x_ref[...].astype(jnp.float32)                        # (NC, HW)

    # in_layers: GroupNorm -> SiLU -> Conv3x3(C -> Cout), batch stacked.
    h = group_norm(x, g1, b1, agg1)
    h = _silu(h)
    h = jnp.dot(w1, conv_cols(h), preferred_element_type=jnp.float32)  # (NCo, HW)

    # emb_layers: SiLU -> Linear (emb rows pre-broadcast to NCo sublanes),
    # fused with the conv1 + linear biases into one broadcast add.
    e = _silu(emb_ref[...].astype(jnp.float32))               # (NCo, E)
    eo = jnp.sum(we * e, axis=-1, keepdims=True)              # (NCo, 1)
    h = h + (eo + bias1)

    # out_layers: GroupNorm -> SiLU -> Dropout -> Conv3x3, fused with the 1x1
    # skip connection on x into a single matmul.
    # TODO(synk): Dropout is identity at inference (eval mode); not applied.
    h = group_norm(h, g2, b2, agg2)
    h = _silu(h)
    out = jnp.dot(w2s, conv_cols(h, extra=x),
                  preferred_element_type=jnp.float32)         # (NCo, HW)
    o_ref[...] = (out + bias2).astype(o_ref.dtype)


def resblock_pallas(x_nchw, emb, params, *, groups, n_per_step=None):
    N, C, H, W = x_nchw.shape
    HW = H * W
    Cout = params["w1"].shape[-1]
    E = emb.shape[-1]
    nb = N if n_per_step is None else n_per_step
    assert N % nb == 0, "n_per_step must divide the batch"
    assert C % groups == 0 and Cout % groups == 0
    NC = nb * C
    NCo = nb * Cout

    f32 = jnp.float32
    # NCHW -> (N*C, HW): free reshape; channels (batch-stacked) on sublanes.
    x_flat = x_nchw.reshape(N * C, HW)
    # emb rows pre-broadcast to one row per (image, out-channel): (N*Cout, E).
    emb_rep = jnp.repeat(emb.astype(f32), Cout, axis=0)

    eyeN = jnp.eye(nb, dtype=f32)

    # --- block-diagonal per-image conv weights (tap-major im2col order) ---
    # W_bd[n*Cout+co, t*nb*Cin + m*Cin + ci] = w[t, ci, co] * [m == n]
    w1_bd = jnp.einsum("tio,nm->notmi", params["w1"].astype(f32),
                       eyeN).reshape(NCo, 9 * NC)
    w2_bd = jnp.einsum("tio,nm->notmi", params["w2"].astype(f32),
                       eyeN).reshape(NCo, 9 * NCo)
    ws_bd = jnp.einsum("io,nm->nomi", params["ws"].astype(f32),
                       eyeN).reshape(NCo, NC)
    w2s_bd = jnp.concatenate([w2_bd, ws_bd], axis=1)          # conv2 + skip

    # emb linear weights, one row per (image, out-channel): row = we[:, co].
    we_rep = jnp.tile(jnp.transpose(params["we"].astype(f32)), (nb, 1))

    # --- block-diagonal GroupNorm group-aggregation matrices ---
    def group_agg(channels):
        cpg = channels // groups
        gi = jnp.arange(channels) // cpg
        same = (gi[:, None] == gi[None, :]).astype(f32)
        return jnp.kron(eyeN, same) / float(cpg * HW)

    def tile_vec(v):            # (1, Cc) -> (nb*Cc, 1)
        return jnp.tile(v.astype(f32).reshape(-1), nb).reshape(-1, 1)

    g1_t, b1_t = tile_vec(params["g1"]), tile_vec(params["b1"])
    g2_t, b2_t = tile_vec(params["g2"]), tile_vec(params["b2"])
    bias1_t = tile_vec(params["cb1"] + params["be"])          # conv1 + linear
    bias2_t = tile_vec(params["cb2"] + params["bs"])          # conv2 + skip

    # --- 3x3 boundary masks hoisted out of the kernel: (8, HW) f32 ---
    pos = jnp.arange(HW)
    yi, xi = pos // W, pos % W
    mrows = []
    for dy in (-1, 0, 1):
        for dx in (-1, 0, 1):
            if dy == 0 and dx == 0:
                continue
            mrows.append(((yi + dy >= 0) & (yi + dy < H) &
                          (xi + dx >= 0) & (xi + dx < W)).astype(f32))
    masks = jnp.stack(mrows, axis=0)                          # (8, HW)

    # --- pack all constants into two slabs (one DMA each) ---
    K1, K2 = 9 * NC, 9 * NCo + NC
    K1p, K2p = _round_up(K1, 128), _round_up(K2, 128)

    def pad_to(a, width):
        return jnp.pad(a, ((0, 0), (0, width - a.shape[1])))

    slab_a = jnp.concatenate(
        [pad_to(w1_bd, K1p), pad_to(w2s_bd, K2p), we_rep, group_agg(Cout),
         bias1_t, g2_t, b2_t, bias2_t], axis=1)               # (NCo, LA)
    slab_b = jnp.concatenate([g1_t, b1_t, group_agg(C)], axis=1)  # (NC, 2+NC)

    kernel = functools.partial(resblock_kernel, H=H, W=W, nb=nb,
                               C=C, Cout=Cout, E=E)

    def const_spec(shape):
        return pl.BlockSpec(shape, lambda b, _nd=len(shape): (0,) * _nd)

    grid_spec = pltpu.PrefetchScalarGridSpec(
        num_scalar_prefetch=0,
        grid=(N // nb,),
        in_specs=[
            pl.BlockSpec((NC, HW), lambda b: (b, 0)),         # x (stacked)
            pl.BlockSpec((NCo, E), lambda b: (b, 0)),         # emb (broadcast)
            const_spec(masks.shape),                          # conv masks
            const_spec(slab_a.shape),                         # weight slab
            const_spec(slab_b.shape),                         # GN1 slab
        ],
        out_specs=pl.BlockSpec((NCo, HW), lambda b: (b, 0)),
    )

    out_flat = pl.pallas_call(
        kernel,
        out_shape=jax.ShapeDtypeStruct((N * Cout, HW), x_nchw.dtype),
        grid_spec=grid_spec,
        compiler_params=pltpu.CompilerParams(
            dimension_semantics=("parallel",)),
    )(x_flat, emb_rep, masks, slab_a, slab_b)

    return out_flat.reshape(N, Cout, H, W)                    # free reshape


# ----- pure-JAX reference (NCHW, matches PyTorch semantics) -----
def resblock_ref(x, emb, p, groups):
    def gn(v, gamma, beta):
        Nn, Cc, Hh, Ww = v.shape
        vg = v.reshape(Nn, groups, Cc // groups, Hh, Ww)
        m = vg.mean(axis=(2, 3, 4), keepdims=True)
        var = vg.var(axis=(2, 3, 4), keepdims=True)
        vn = ((vg - m) / jnp.sqrt(var + EPS)).reshape(Nn, Cc, Hh, Ww)
        return vn * gamma.reshape(1, Cc, 1, 1) + beta.reshape(1, Cc, 1, 1)

    def conv3(v, w9, b):
        Cin, Co = w9.shape[1], w9.shape[2]
        w_oihw = jnp.transpose(w9.reshape(3, 3, Cin, Co), (3, 2, 0, 1))
        out = lax.conv_general_dilated(
            v, w_oihw, (1, 1), ((1, 1), (1, 1)),
            dimension_numbers=("NCHW", "OIHW", "NCHW"))
        return out + b.reshape(1, Co, 1, 1)

    silu = lambda v: v * jax.nn.sigmoid(v)
    h = conv3(silu(gn(x, p["g1"], p["b1"])), p["w1"], p["cb1"])
    eo = silu(emb) @ p["we"] + p["be"]
    h = h + eo[:, :, None, None]
    h = conv3(silu(gn(h, p["g2"], p["b2"])), p["w2"], p["cb2"])
    skip = jnp.einsum("nchw,co->nohw", x, p["ws"]) + p["bs"].reshape(1, -1, 1, 1)
    return skip + h


if __name__ == "__main__":
    N, C, Cout, E, H, W, G = 2, 4, 8, 32, 16, 16, 2

    key = jax.random.PRNGKey(0)
    ks = jax.random.split(key, 14)

    # NOTE: the real module zero-inits conv2 (zero_module) and uses ones/zeros
    # GroupNorm affine params; random values are used here so every branch of
    # out_layers is exercised numerically (the kernel is parameter-agnostic).
    params = dict(
        g1=1.0 + 0.1 * jax.random.normal(ks[0], (1, C), jnp.float32),
        b1=0.1 * jax.random.normal(ks[1], (1, C), jnp.float32),
        w1=0.1 * jax.random.normal(ks[2], (9, C, Cout), jnp.float32),
        cb1=0.1 * jax.random.normal(ks[3], (1, Cout), jnp.float32),
        we=0.1 * jax.random.normal(ks[4], (E, Cout), jnp.float32),
        be=0.1 * jax.random.normal(ks[5], (1, Cout), jnp.float32),
        g2=1.0 + 0.1 * jax.random.normal(ks[6], (1, Cout), jnp.float32),
        b2=0.1 * jax.random.normal(ks[7], (1, Cout), jnp.float32),
        w2=0.1 * jax.random.normal(ks[8], (9, Cout, Cout), jnp.float32),
        cb2=0.1 * jax.random.normal(ks[9], (1, Cout), jnp.float32),
        ws=0.1 * jax.random.normal(ks[10], (C, Cout), jnp.float32),
        bs=0.1 * jax.random.normal(ks[11], (1, Cout), jnp.float32),
    )

    x = jax.random.normal(ks[12], (N, C, H, W), jnp.float32)
    emb = jax.random.normal(ks[13], (N, E), jnp.float32)

    out = resblock_pallas(x, emb, params, groups=G)
    out = jax.block_until_ready(out)

    ref = resblock_ref(x, emb, params, G)
    assert out.shape == (N, Cout, H, W)
    assert jnp.allclose(out, ref, atol=1e-3, rtol=1e-3), (
        float(jnp.max(jnp.abs(out - ref))))

    print("KERNEL_OK")
</pallas_src>

<mosaic_0001>
module attributes {stable_mosaic.version = 11 : i64} {
  func.func @resblock_kernel(%arg0: i32, %arg1: memref<8x256xf32, #tpu.memory_space<vmem>>, %arg2: memref<16x32xf32, #tpu.memory_space<vmem>>, %arg3: memref<8x256xf32, #tpu.memory_space<vmem>>, %arg4: memref<16x436xf32, #tpu.memory_space<vmem>>, %arg5: memref<8x10xf32, #tpu.memory_space<vmem>>, %arg6: memref<16x256xf32, #tpu.memory_space<vmem>>) attributes {dimension_semantics = [#tpu.dimension_semantics<parallel>], iteration_bounds = array<i64: 1>, scalar_prefetch = 0 : i64, scratch_operands = 0 : i64, tpu.core_type = #tpu.core_type<tc>, window_params = [{transform_indices = @transform_0, window_bounds = array<i64: 8, 256>}, {transform_indices = @transform_1, window_bounds = array<i64: 16, 32>}, {pipeline_mode = #tpu.pipeline_mode<synchronous>, transform_indices = @transform_2, window_bounds = array<i64: 8, 256>}, {pipeline_mode = #tpu.pipeline_mode<synchronous>, transform_indices = @transform_3, window_bounds = array<i64: 16, 436>}, {pipeline_mode = #tpu.pipeline_mode<synchronous>, transform_indices = @transform_4, window_bounds = array<i64: 8, 10>}, {transform_indices = @transform_5, window_bounds = array<i64: 16, 256>}]} {
    %c0 = arith.constant 0 : index
    %c0_0 = arith.constant 0 : index
    %0 = vector.load %arg4[%c0, %c0_0] : memref<16x436xf32, #tpu.memory_space<vmem>>, vector<16x72xf32>
    %c0_1 = arith.constant 0 : index
    %c128 = arith.constant 128 : index
    %1 = vector.load %arg4[%c0_1, %c128] : memref<16x436xf32, #tpu.memory_space<vmem>>, vector<16x152xf32>
    %c0_2 = arith.constant 0 : index
    %c384 = arith.constant 384 : index
    %2 = vector.load %arg4[%c0_2, %c384] : memref<16x436xf32, #tpu.memory_space<vmem>>, vector<16x32xf32>
    %c0_3 = arith.constant 0 : index
    %c416 = arith.constant 416 : index
    %3 = vector.load %arg4[%c0_3, %c416] : memref<16x436xf32, #tpu.memory_space<vmem>>, vector<16x16xf32>
    %c0_4 = arith.constant 0 : index
    %c432 = arith.constant 432 : index
    %4 = vector.load %arg4[%c0_4, %c432] : memref<16x436xf32, #tpu.memory_space<vmem>>, vector<16x1xf32>
    %c0_5 = arith.constant 0 : index
    %c433 = arith.constant 433 : index
    %5 = vector.load %arg4[%c0_5, %c433] : memref<16x436xf32, #tpu.memory_space<vmem>>, vector<16x1xf32>
    %c0_6 = arith.constant 0 : index
    %c434 = arith.constant 434 : index
    %6 = vector.load %arg4[%c0_6, %c434] : memref<16x436xf32, #tpu.memory_space<vmem>>, vector<16x1xf32>
    %c0_7 = arith.constant 0 : index
    %c435 = arith.constant 435 : index
    %7 = vector.load %arg4[%c0_7, %c435] : memref<16x436xf32, #tpu.memory_space<vmem>>, vector<16x1xf32>
    %c0_8 = arith.constant 0 : index
    %c0_9 = arith.constant 0 : index
    %8 = vector.load %arg5[%c0_8, %c0_9] : memref<8x10xf32, #tpu.memory_space<vmem>>, vector<8x1xf32>
    %c0_10 = arith.constant 0 : index
    %c1 = arith.constant 1 : index
    %9 = vector.load %arg5[%c0_10, %c1] : memref<8x10xf32, #tpu.memory_space<vmem>>, vector<8x1xf32>
    %c0_11 = arith.constant 0 : index
    %c2 = arith.constant 2 : index
    %10 = vector.load %arg5[%c0_11, %c2] : memref<8x10xf32, #tpu.memory_space<vmem>>, vector<8x8xf32>
    %c0_12 = arith.constant 0 : index
    %c0_13 = arith.constant 0 : index
    %11 = vector.load %arg3[%c0_12, %c0_13] : memref<8x256xf32, #tpu.memory_space<vmem>>, vector<8x256xf32>
    %c0_14 = arith.constant 0 : index
    %c0_15 = arith.constant 0 : index
    %12 = vector.load %arg1[%c0_14, %c0_15] : memref<8x256xf32, #tpu.memory_space<vmem>>, vector<8x256xf32>
    %cst = arith.constant dense<0.000000e+00> : vector<8xf32>
    %13 = vector.multi_reduction <add>, %12, %cst [1] : vector<8x256xf32> to vector<8xf32>
    %14 = vector.shape_cast %13 : vector<8xf32> to vector<8x1xf32>
    %15 = arith.mulf %12, %12 : vector<8x256xf32>
    %cst_16 = arith.constant dense<0.000000e+00> : vector<8xf32>
    %16 = vector.multi_reduction <add>, %15, %cst_16 [1] : vector<8x256xf32> to vector<8xf32>
    %17 = vector.shape_cast %16 : vector<8xf32> to vector<8x1xf32>
    %18 = tpu.concatenate %14, %17 in 1 : vector<8x1xf32>, vector<8x1xf32> -> vector<8x2xf32>
    %cst_17 = arith.constant dense<0.000000e+00> : vector<8x2xf32>
    %19 = tpu.matmul %10, %18, %cst_17 {dimension_numbers = #tpu.dot_dimension_numbers<[1], [0], [0], [1], [0, 0, 1, 1], [], []>} : vector<8x8xf32>, vector<8x2xf32>, vector<8x2xf32> -> vector<8x2xf32>
    %20 = vector.extract_strided_slice %19 {offsets = [0, 0], sizes = [8, 1], strides = [1, 1]} : vector<8x2xf32> to vector<8x1xf32>
    %21 = vector.extract_strided_slice %19 {offsets = [0, 1], sizes = [8, 1], strides = [1, 1]} : vector<8x2xf32> to vector<8x1xf32>
    %22 = arith.mulf %20, %20 : vector<8x1xf32>
    %23 = arith.subf %21, %22 : vector<8x1xf32>
    %cst_18 = arith.constant 0.000000e+00 : f32
    %24 = vector.broadcast %cst_18 : f32 to vector<8x1xf32>
    %25 = arith.maximumf %23, %24 : vector<8x1xf32>
    %26 = vector.broadcast %20 : vector<8x1xf32> to vector<8x256xf32>
    %27 = arith.subf %12, %26 : vector<8x256xf32>
    %cst_19 = arith.constant 9.99999974E-6 : f32
    %28 = vector.broadcast %cst_19 : f32 to vector<8x1xf32>
    %29 = arith.addf %25, %28 : vector<8x1xf32>
    %30 = math.rsqrt %29 : vector<8x1xf32>
    %31 = vector.broadcast %30 : vector<8x1xf32> to vector<8x256xf32>
    %32 = arith.mulf %27, %31 : vector<8x256xf32>
    %33 = vector.broadcast %8 : vector<8x1xf32> to vector<8x256xf32>
    %34 = arith.mulf %32, %33 : vector<8x256xf32>
    %35 = vector.broadcast %9 : vector<8x1xf32> to vector<8x256xf32>
    %36 = arith.addf %34, %35 : vector<8x256xf32>
    %37 = arith.negf %36 : vector<8x256xf32>
    %38 = math.exp %37 : vector<8x256xf32>
    %cst_20 = arith.constant 1.000000e+00 : f32
    %39 = vector.broadcast %cst_20 : f32 to vector<8x256xf32>
    %40 = arith.addf %39, %38 : vector<8x256xf32>
    %41 = arith.divf %39, %40 : vector<8x256xf32>
    %42 = arith.mulf %36, %41 : vector<8x256xf32>
    %c17_i32 = arith.constant 17 : i32
    %43 = tpu.dynamic_rotate %42 by %c17_i32 dim 1 : vector<8x256xf32>, i32 -> vector<8x256xf32>
    %44 = vector.extract_strided_slice %11 {offsets = [0, 0], sizes = [1, 256], strides = [1, 1]} : vector<8x256xf32> to vector<1x256xf32>
    %45 = vector.broadcast %44 : vector<1x256xf32> to vector<8x256xf32>
    %46 = arith.mulf %43, %45 : vector<8x256xf32>
    %c16_i32 = arith.constant 16 : i32
    %47 = tpu.dynamic_rotate %42 by %c16_i32 dim 1 : vector<8x256xf32>, i32 -> vector<8x256xf32>
    %48 = vector.extract_strided_slice %11 {offsets = [1, 0], sizes = [1, 256], strides = [1, 1]} : vector<8x256xf32> to vector<1x256xf32>
    %49 = vector.broadcast %48 : vector<1x256xf32> to vector<8x256xf32>
    %50 = arith.mulf %47, %49 : vector<8x256xf32>
    %c15_i32 = arith.constant 15 : i32
    %51 = tpu.dynamic_rotate %42 by %c15_i32 dim 1 : vector<8x256xf32>, i32 -> vector<8x256xf32>
    %52 = vector.extract_strided_slice %11 {offsets = [2, 0], sizes = [1, 256], strides = [1, 1]} : vector<8x256xf32> to vector<1x256xf32>
    %53 = vector.broadcast %52 : vector<1x256xf32> to vector<8x256xf32>
    %54 = arith.mulf %51, %53 : vector<8x256xf32>
    %c1_i32 = arith.constant 1 : i32
    %55 = tpu.dynamic_rotate %42 by %c1_i32 dim 1 : vector<8x256xf32>, i32 -> vector<8x256xf32>
    %56 = vector.extract_strided_slice %11 {offsets = [3, 0], sizes = [1, 256], strides = [1, 1]} : vector<8x256xf32> to vector<1x256xf32>
    %57 = vector.broadcast %56 : vector<1x256xf32> to vector<8x256xf32>
    %58 = arith.mulf %55, %57 : vector<8x256xf32>
    %c255_i32 = arith.constant 255 : i32
    %59 = tpu.dynamic_rotate %42 by %c255_i32 dim 1 : vector<8x256xf32>, i32 -> vector<8x256xf32>
    %60 = vector.extract_strided_slice %11 {offsets = [4, 0], sizes = [1, 256], strides = [1, 1]} : vector<8x256xf32> to vector<1x256xf32>
    %61 = vector.broadcast %60 : vector<1x256xf32> to vector<8x256xf32>
    %62 = arith.mulf %59, %61 : vector<8x256xf32>
    %c241_i32 = arith.constant 241 : i32
    %63 = tpu.dynamic_rotate %42 by %c241_i32 dim 1 : vector<8x256xf32>, i32 -> vector<8x256xf32>
    %64 = vector.extract_strided_slice %11 {offsets = [5, 0], sizes = [1, 256], strides = [1, 1]} : vector<8x256xf32> to vector<1x256xf32>
    %65 = vector.broadcast %64 : vector<1x256xf32> to vector<8x256xf32>
    %66 = arith.mulf %63, %65 : vector<8x256xf32>
    %c240_i32 = arith.constant 240 : i32
    %67 = tpu.dynamic_rotate %42 by %c240_i32 dim 1 : vector<8x256xf32>, i32 -> vector<8x256xf32>
    %68 = vector.extract_strided_slice %11 {offsets = [6, 0], sizes = [1, 256], strides = [1, 1]} : vector<8x256xf32> to vector<1x256xf32>
    %69 = vector.broadcast %68 : vector<1x256xf32> to vector<8x256xf32>
    %70 = arith.mulf %67, %69 : vector<8x256xf32>
    %c239_i32 = arith.constant 239 : i32
    %71 = tpu.dynamic_rotate %42 by %c239_i32 dim 1 : vector<8x256xf32>, i32 -> vector<8x256xf32>
    %72 = vector.extract_strided_slice %11 {offsets = [7, 0], sizes = [1, 256], strides = [1, 1]} : vector<8x256xf32> to vector<1x256xf32>
    %73 = vector.broadcast %72 : vector<1x256xf32> to vector<8x256xf32>
    %74 = arith.mulf %71, %73 : vector<8x256xf32>
    %75 = tpu.concatenate %46, %50, %54, %58, %42, %62, %66, %70, %74 in 0 : vector<8x256xf32>, vector<8x256xf32>, vector<8x256xf32>, vector<8x256xf32>, vector<8x256xf32>, vector<8x256xf32>, vector<8x256xf32>, vector<8x256xf32>, vector<8x256xf32> -> vector<72x256xf32>
    %cst_21 = arith.constant dense<0.000000e+00> : vector<16x256xf32>
    %76 = tpu.matmul %0, %75, %cst_21 {dimension_numbers = #tpu.dot_dimension_numbers<[1], [0], [0], [1], [0, 0, 1, 1], [], []>} : vector<16x72xf32>, vector<72x256xf32>, vector<16x256xf32> -> vector<16x256xf32>
    %c0_22 = arith.constant 0 : index
    %c0_23 = arith.constant 0 : index
    %77 = vector.load %arg2[%c0_22, %c0_23] : memref<16x32xf32, #tpu.memory_space<vmem>>, vector<16x32xf32>
    %78 = arith.negf %77 : vector<16x32xf32>
    %79 = math.exp %78 : vector<16x32xf32>
    %cst_24 = arith.constant 1.000000e+00 : f32
    %80 = vector.broadcast %cst_24 : f32 to vector<16x32xf32>
    %81 = arith.addf %80, %79 : vector<16x32xf32>
    %82 = arith.divf %80, %81 : vector<16x32xf32>
    %83 = arith.mulf %77, %82 : vector<16x32xf32>
    %84 = arith.mulf %2, %83 : vector<16x32xf32>
    %cst_25 = arith.constant dense<0.000000e+00> : vector<16xf32>
    %85 = vector.multi_reduction <add>, %84, %cst_25 [1] : vector<16x32xf32> to vector<16xf32>
    %86 = vector.shape_cast %85 : vector<16xf32> to vector<16x1xf32>
    %87 = arith.addf %86, %4 : vector<16x1xf32>
    %88 = vector.broadcast %87 : vector<16x1xf32> to vector<16x256xf32>
    %89 = arith.addf %76, %88 : vector<16x256xf32>
    %cst_26 = arith.constant dense<0.000000e+00> : vector<16xf32>
    %90 = vector.multi_reduction <add>, %89, %cst_26 [1] : vector<16x256xf32> to vector<16xf32>
    %91 = vector.shape_cast %90 : vector<16xf32> to vector<16x1xf32>
    %92 = arith.mulf %89, %89 : vector<16x256xf32>
    %cst_27 = arith.constant dense<0.000000e+00> : vector<16xf32>
    %93 = vector.multi_reduction <add>, %92, %cst_27 [1] : vector<16x256xf32> to vector<16xf32>
    %94 = vector.shape_cast %93 : vector<16xf32> to vector<16x1xf32>
    %95 = tpu.concatenate %91, %94 in 1 : vector<16x1xf32>, vector<16x1xf32> -> vector<16x2xf32>
    %cst_28 = arith.constant dense<0.000000e+00> : vector<16x2xf32>
    %96 = tpu.matmul %3, %95, %cst_28 {dimension_numbers = #tpu.dot_dimension_numbers<[1], [0], [0], [1], [0, 0, 1, 1], [], []>} : vector<16x16xf32>, vector<16x2xf32>, vector<16x2xf32> -> vector<16x2xf32>
    %97 = vector.extract_strided_slice %96 {offsets = [0, 0], sizes = [16, 1], strides = [1, 1]} : vector<16x2xf32> to vector<16x1xf32>
    %98 = vector.extract_strided_slice %96 {offsets = [0, 1], sizes = [16, 1], strides = [1, 1]} : vector<16x2xf32> to vector<16x1xf32>
    %99 = arith.mulf %97, %97 : vector<16x1xf32>
    %100 = arith.subf %98, %99 : vector<16x1xf32>
    %cst_29 = arith.constant 0.000000e+00 : f32
    %101 = vector.broadcast %cst_29 : f32 to vector<16x1xf32>
    %102 = arith.maximumf %100, %101 : vector<16x1xf32>
    %103 = vector.broadcast %97 : vector<16x1xf32> to vector<16x256xf32>
    %104 = arith.subf %89, %103 : vector<16x256xf32>
    %cst_30 = arith.constant 9.99999974E-6 : f32
    %105 = vector.broadcast %cst_30 : f32 to vector<16x1xf32>
    %106 = arith.addf %102, %105 : vector<16x1xf32>
    %107 = math.rsqrt %106 : vector<16x1xf32>
    %108 = vector.broadcast %107 : vector<16x1xf32> to vector<16x256xf32>
    %109 = arith.mulf %104, %108 : vector<16x256xf32>
    %110 = vector.broadcast %5 : vector<16x1xf32> to vector<16x256xf32>
    %111 = arith.mulf %109, %110 : vector<16x256xf32>
    %112 = vector.broadcast %6 : vector<16x1xf32> to vector<16x256xf32>
    %113 = arith.addf %111, %112 : vector<16x256xf32>
    %114 = arith.negf %113 : vector<16x256xf32>
    %115 = math.exp %114 : vector<16x256xf32>
    %cst_31 = arith.constant 1.000000e+00 : f32
    %116 = vector.broadcast %cst_31 : f32 to vector<16x256xf32>
    %117 = arith.addf %116, %115 : vector<16x256xf32>
    %118 = arith.divf %116, %117 : vector<16x256xf32>
    %119 = arith.mulf %113, %118 : vector<16x256xf32>
    %c17_i32_32 = arith.constant 17 : i32
    %120 = tpu.dynamic_rotate %119 by %c17_i32_32 dim 1 : vector<16x256xf32>, i32 -> vector<16x256xf32>
    %121 = vector.extract_strided_slice %11 {offsets = [0, 0], sizes = [1, 256], strides = [1, 1]} : vector<8x256xf32> to vector<1x256xf32>
    %122 = vector.broadcast %121 : vector<1x256xf32> to vector<16x256xf32>
    %123 = arith.mulf %120, %122 : vector<16x256xf32>
    %c16_i32_33 = arith.constant 16 : i32
    %124 = tpu.dynamic_rotate %119 by %c16_i32_33 dim 1 : vector<16x256xf32>, i32 -> vector<16x256xf32>
    %125 = vector.extract_strided_slice %11 {offsets = [1, 0], sizes = [1, 256], strides = [1, 1]} : vector<8x256xf32> to vector<1x256xf32>
    %126 = vector.broadcast %125 : vector<1x256xf32> to vector<16x256xf32>
    %127 = arith.mulf %124, %126 : vector<16x256xf32>
    %c15_i32_34 = arith.constant 15 : i32
    %128 = tpu.dynamic_rotate %119 by %c15_i32_34 dim 1 : vector<16x256xf32>, i32 -> vector<16x256xf32>
    %129 = vector.extract_strided_slice %11 {offsets = [2, 0], sizes = [1, 256], strides = [1, 1]} : vector<8x256xf32> to vector<1x256xf32>
    %130 = vector.broadcast %129 : vector<1x256xf32> to vector<16x256xf32>
    %131 = arith.mulf %128, %130 : vector<16x256xf32>
    %c1_i32_35 = arith.constant 1 : i32
    %132 = tpu.dynamic_rotate %119 by %c1_i32_35 dim 1 : vector<16x256xf32>, i32 -> vector<16x256xf32>
    %133 = vector.extract_strided_slice %11 {offsets = [3, 0], sizes = [1, 256], strides = [1, 1]} : vector<8x256xf32> to vector<1x256xf32>
    %134 = vector.broadcast %133 : vector<1x256xf32> to vector<16x256xf32>
    %135 = arith.mulf %132, %134 : vector<16x256xf32>
    %c255_i32_36 = arith.constant 255 : i32
    %136 = tpu.dynamic_rotate %119 by %c255_i32_36 dim 1 : vector<16x256xf32>, i32 -> vector<16x256xf32>
    %137 = vector.extract_strided_slice %11 {offsets = [4, 0], sizes = [1, 256], strides = [1, 1]} : vector<8x256xf32> to vector<1x256xf32>
    %138 = vector.broadcast %137 : vector<1x256xf32> to vector<16x256xf32>
    %139 = arith.mulf %136, %138 : vector<16x256xf32>
    %c241_i32_37 = arith.constant 241 : i32
    %140 = tpu.dynamic_rotate %119 by %c241_i32_37 dim 1 : vector<16x256xf32>, i32 -> vector<16x256xf32>
    %141 = vector.extract_strided_slice %11 {offsets = [5, 0], sizes = [1, 256], strides = [1, 1]} : vector<8x256xf32> to vector<1x256xf32>
    %142 = vector.broadcast %141 : vector<1x256xf32> to vector<16x256xf32>
    %143 = arith.mulf %140, %142 : vector<16x256xf32>
    %c240_i32_38 = arith.constant 240 : i32
    %144 = tpu.dynamic_rotate %119 by %c240_i32_38 dim 1 : vector<16x256xf32>, i32 -> vector<16x256xf32>
    %145 = vector.extract_strided_slice %11 {offsets = [6, 0], sizes = [1, 256], strides = [1, 1]} : vector<8x256xf32> to vector<1x256xf32>
    %146 = vector.broadcast %145 : vector<1x256xf32> to vector<16x256xf32>
    %147 = arith.mulf %144, %146 : vector<16x256xf32>
    %c239_i32_39 = arith.constant 239 : i32
    %148 = tpu.dynamic_rotate %119 by %c239_i32_39 dim 1 : vector<16x256xf32>, i32 -> vector<16x256xf32>
    %149 = vector.extract_strided_slice %11 {offsets = [7, 0], sizes = [1, 256], strides = [1, 1]} : vector<8x256xf32> to vector<1x256xf32>
    %150 = vector.broadcast %149 : vector<1x256xf32> to vector<16x256xf32>
    %151 = arith.mulf %148, %150 : vector<16x256xf32>
    %152 = tpu.concatenate %123, %127, %131, %135, %119, %139, %143, %147, %151, %12 in 0 : vector<16x256xf32>, vector<16x256xf32>, vector<16x256xf32>, vector<16x256xf32>, vector<16x256xf32>, vector<16x256xf32>, vector<16x256xf32>, vector<16x256xf32>, vector<16x256xf32>, vector<8x256xf32> -> vector<152x256xf32>
    %cst_40 = arith.constant dense<0.000000e+00> : vector<16x256xf32>
    %153 = tpu.matmul %1, %152, %cst_40 {dimension_numbers = #tpu.dot_dimension_numbers<[1], [0], [0], [1], [0, 0, 1, 1], [], []>} : vector<16x152xf32>, vector<152x256xf32>, vector<16x256xf32> -> vector<16x256xf32>
    %154 = vector.broadcast %7 : vector<16x1xf32> to vector<16x256xf32>
    %155 = arith.addf %153, %154 : vector<16x256xf32>
    %c0_41 = arith.constant 0 : index
    %c0_42 = arith.constant 0 : index
    %156 = vector.load %arg6[%c0_41, %c0_42] : memref<16x256xf32, #tpu.memory_space<vmem>>, vector<16x256xf32>
    tpu.vector_store %arg6[%c0_41, %c0_42], %155 {strides = array<i32>} : memref<16x256xf32, #tpu.memory_space<vmem>>, vector<16x256xf32>,
    return
  }
  func.func @transform_0(%arg0: i32) -> (i32, i32) {
    %c0_i32 = arith.constant 0 : i32
    %c0_i32_0 = arith.constant 0 : i32
    return %arg0, %c0_i32 : i32, i32
  }
  func.func @transform_1(%arg0: i32) -> (i32, i32) {
    %c0_i32 = arith.constant 0 : i32
    %c0_i32_0 = arith.constant 0 : i32
    return %arg0, %c0_i32 : i32, i32
  }
  func.func @transform_2(%arg0: i32) -> (i32, i32) {
    %c0_i32 = arith.constant 0 : i32
    %c0_i32_0 = arith.constant 0 : i32
    %c0_i32_1 = arith.constant 0 : i32
    return %c0_i32, %c0_i32_0 : i32, i32
  }
  func.func @transform_3(%arg0: i32) -> (i32, i32) {
    %c0_i32 = arith.constant 0 : i32
    %c0_i32_0 = arith.constant 0 : i32
    %c0_i32_1 = arith.constant 0 : i32
    return %c0_i32, %c0_i32_0 : i32, i32
  }
  func.func @transform_4(%arg0: i32) -> (i32, i32) {
    %c0_i32 = arith.constant 0 : i32
    %c0_i32_0 = arith.constant 0 : i32
    %c0_i32_1 = arith.constant 0 : i32
    return %c0_i32, %c0_i32_0 : i32, i32
  }
  func.func @transform_5(%arg0: i32) -> (i32, i32) {
    %c0_i32 = arith.constant 0 : i32
    %c0_i32_0 = arith.constant 0 : i32
    return %arg0, %c0_i32 : i32, i32
  }
}

</mosaic_0001>

<llo_original>
// kernel: tpu_custom_call.1
$region0: #{tpu_custom_call.1}
  #allocation0 [shape = 'u32[]', space=smem, size = 0x4, offset = 0x4, fixed_abs, tag = 'smem constant byte address 0x4 - core index']
  #allocation1 [shape = 'u32[144,128]{1,0:T(1,128)}', space=vmem, size = 0x12000, scoped, tag = 'internal scratch']
  %s0 = inlined_call_operand.hbm [shape: f32[8,256], index: 0, kind: input, shape index: {}]
  %s1 = inlined_call_operand.hbm [shape: f32[16,32], index: 1, kind: input, shape index: {}]
  %s2 = inlined_call_operand.hbm [shape: f32[8,256], index: 2, kind: input, shape index: {}]
  %s3 = inlined_call_operand.hbm [shape: f32[16,436], index: 3, kind: input, shape index: {}]
  %s4 = inlined_call_operand.vmem [shape: f32[8,10], index: 4, kind: input, shape index: {}]
  %s5 = inlined_call_operand.hbm [shape: f32[16,256], index: 5, kind: output, shape index: {}]
  %s6 = sld [smem:[#allocation0]]
  $region46: #{tpu_custom_call.1} parent=0
    _
  %s8 = ssub.s32 1, %s6
  %s9 = scalar_select 0, %s8, %s6
  $region1: #{tpu_custom_call.1} parent=0
    #allocation2 [shape = 'u8[8192]{0}', space=vmem, size = 0x2000, scoped, tag = 'input window, operand 0, single buffered']
    #allocation3 [shape = 's32[1]{0}', space=sflag, size = 0x4, scoped, tag = 'scoped memory for tpu_custom_call.1']
    #allocation4 [shape = 's32[1]{0}', space=sflag, size = 0x4, scoped, tag = 'scoped memory for tpu_custom_call.1']
    #allocation5 [shape = 'u8[8192]{0}', space=vmem, size = 0x2000, scoped, tag = 'input window, operand 1, single buffered']
    #allocation6 [shape = 's32[1]{0}', space=sflag, size = 0x4, scoped, tag = 'scoped memory for tpu_custom_call.1']
    #allocation7 [shape = 'u8[8192]{0}', space=vmem, size = 0x2000, scoped, tag = 'input window, operand 2, single buffered']
    #allocation8 [shape = 'u8[32768]{0}', space=vmem, size = 0x8000, scoped, tag = 'input window, operand 3, single buffered']
    #allocation9 [shape = 's32[1]{0}', space=sflag, size = 0x4, scoped, tag = 'scoped memory for tpu_custom_call.1']
    #allocation10 [shape = 'u8[16384]{0}', space=vmem, size = 0x4000, scoped, tag = 'output window, operand 0, single buffered']
    %10 = vsyncpa [#allocation3], 0
    %11 = vsyncpa [#allocation6], 0
    %12 = vsyncpa [#allocation9], 0
    %13 = vsyncpa [#allocation4], 0
    // Predicated region
    $region2: #{tpu_custom_call.1} parent=1 // pred_check
      _
    $region3: #{tpu_custom_call.1} parent=1 // pred_check_branch
      %15 = sbr.rel (0) target = $region5
    $region4: #{tpu_custom_call.1} parent=1 // pred_region
      %s17 = ssub.s32 256, 256
      %18 = vsyncadd [#allocation3], %s17
      %s20 = sshll.u32 [#allocation2], 4
      %s21 = int_to_ptr.vmem [resolvable:$true] %s20
      %23 = dma.hbm_to_vmem [thread:$0]  %s0, 256, %s21, [#allocation3]
    $region5: #{tpu_custom_call.1} parent=1 // pred_fallthru
      _
    // Predicated region
    $region6: #{tpu_custom_call.1} parent=1 // pred_check
      _
    $region7: #{tpu_custom_call.1} parent=1 // pred_check_branch
      %25 = sbr.rel (0) target = $region9
    $region8: #{tpu_custom_call.1} parent=1 // pred_region
      %s27 = ssub.s32 256, 256
      %28 = vsyncadd [#allocation6], %s27
      %s29 = sshll.u32 [#allocation5], 4
      %s30 = int_to_ptr.vmem [resolvable:$true] %s29
      %35 = dma.hbm_to_vmem [thread:$0]  %s1, 256, %s30, [#allocation6], 128, 128, 8
    $region9: #{tpu_custom_call.1} parent=1 // pred_fallthru
      _
    // Predicated region
    $region10: #{tpu_custom_call.1} parent=1 // pred_check
      _
    $region11: #{tpu_custom_call.1} parent=1 // pred_check_branch
      %37 = sbr.rel (0) target = $region13
    $region12: #{tpu_custom_call.1} parent=1 // pred_region
      %s39 = ssub.s32 256, 256
      %40 = vsyncadd [#allocation6], %s39
      %s42 = sshll.u32 [#allocation7], 4
      %s43 = int_to_ptr.vmem [resolvable:$true] %s42
      %45 = dma.hbm_to_vmem [thread:$0]  %s2, 256, %s43, [#allocation6]
    $region13: #{tpu_custom_call.1} parent=1 // pred_fallthru
      _
    // Predicated region
    $region14: #{tpu_custom_call.1} parent=1 // pred_check
      _
    $region15: #{tpu_custom_call.1} parent=1 // pred_check_branch
      %47 = sbr.rel (0) target = $region17
    $region16: #{tpu_custom_call.1} parent=1 // pred_region
      %s49 = ssub.s32 1024, 1024
      %50 = vsyncadd [#allocation9], %s49
      %s51 = sshll.u32 [#allocation8], 4
      %s52 = int_to_ptr.vmem [resolvable:$true] %s51
      %57 = dma.hbm_to_vmem [thread:$0]  %s3, 1024, %s52, [#allocation9], 512, 512, 32
    $region17: #{tpu_custom_call.1} parent=1 // pred_fallthru
      _
    // Predicated region
    $region18: #{tpu_custom_call.1} parent=1 // pred_check
      _
    $region19: #{tpu_custom_call.1} parent=1 // pred_check_branch
      %59 = sbr.rel (0) target = $region21
    $region20: #{tpu_custom_call.1} parent=1 // pred_region
      _
    $region21: #{tpu_custom_call.1} parent=1 // pred_fallthru
      _
    // Predicated region
    $region22: #{tpu_custom_call.1} parent=1 // pred_check
      _
    $region23: #{tpu_custom_call.1} parent=1 // pred_check_branch
      %61 = sbr.rel (0) target = $region25
    $region24: #{tpu_custom_call.1} parent=1 // pred_region
      %62 = dma.done [#allocation3], 256
    $region25: #{tpu_custom_call.1} parent=1 // pred_fallthru
      _
    // Predicated region
    $region26: #{tpu_custom_call.1} parent=1 // pred_check
      _
    $region27: #{tpu_custom_call.1} parent=1 // pred_check_branch
      %64 = sbr.rel (0) target = $region29
    $region28: #{tpu_custom_call.1} parent=1 // pred_region
      %65 = dma.done [#allocation6], 256
    $region29: #{tpu_custom_call.1} parent=1 // pred_fallthru
      _
    // Predicated region
    $region30: #{tpu_custom_call.1} parent=1 // pred_check
      _
    $region31: #{tpu_custom_call.1} parent=1 // pred_check_branch
      %67 = sbr.rel (0) target = $region33
    $region32: #{tpu_custom_call.1} parent=1 // pred_region
      %68 = dma.done [#allocation6], 256
    $region33: #{tpu_custom_call.1} parent=1 // pred_fallthru
      _
    // Predicated region
    $region34: #{tpu_custom_call.1} parent=1 // pred_check
      _
    $region35: #{tpu_custom_call.1} parent=1 // pred_check_branch
      %70 = sbr.rel (0) target = $region37
    $region36: #{tpu_custom_call.1} parent=1 // pred_region
      %71 = dma.done [#allocation9], 1024
    $region37: #{tpu_custom_call.1} parent=1 // pred_fallthru
      _
    %v72 = vld [vmem:[#allocation8] sm:$0xff]
    %v73 = vld [vmem:[#allocation8 + $0x20] sm:$0xff]
    %v74 = vld [vmem:[#allocation8 + $0x8] sm:$0xff]
    %v75 = vld [vmem:[#allocation8 + $0x10] sm:$0xff]
    %v76 = vld [vmem:[#allocation8 + $0x28] sm:$0xff]
    %v77 = vld [vmem:[#allocation8 + $0x30] sm:$0xff]
    %v78 = vld [vmem:[#allocation8 + $0x18] sm:$0xff]
    %v79 = vld [vmem:[#allocation8 + $0x38] sm:$0xff]
    %v80 = vld [vmem:[%s4] sm:$0xff]
    %v81 = vld [vmem:[#allocation7] sm:$0xff]
    %v82 = vld [vmem:[#allocation7 + $0x8] sm:$0xff]
    %v83 = vld [vmem:[#allocation2] sm:$0xff]
    %v84 = vld [vmem:[#allocation2 + $0x8] sm:$0xff]
    %v85 = vadd.f32 %v83, %v84
    %86 = vadd.xlane.f32.xlu0 %v85
    %v87 = vpop.xlane.xlu0 %86
    %v88 = vmul.f32 %v83, %v83
    %v89 = vmul.f32 %v84, %v84
    %v90 = vadd.f32 %v88, %v89
    %91 = vadd.xlane.f32.xlu0 %v90
    %v92 = vpop.xlane.xlu0 %91
    %vm93 = vcmask 7168
    %v94 = vsel %vm93, %v87, %v92
    %96 = vrot.lane.b32.xlu0 %v80, 126
    %v97 = vpop.permute.xlu0 %96
    %vm98 = vcmask 64512
    %v99 = vsel %vm98, %v97, 0
    %101 = vmatprep.subr.mxu0 0.0
    %102 = vmatpush1.msra.mxu0 %v94
    %103 = vmatprep.subr.mxu0 0.0
    %104 = vmatpush1.msra.mxu0 0.0
    %105 = vmatprep.subr.mxu0 0.0
    %106 = vmatpush1.msra.mxu0 0.0
    %107 = vmatprep.subr.mxu0 0.0
    %108 = vmatpush1.msra.mxu0 0.0
    %109 = vmatprep.subr.mxu0 0.0
    %110 = vmatpush1.msra.mxu0 0.0
    %111 = vmatprep.subr.mxu0 0.0
    %112 = vmatpush1.msra.mxu0 0.0
    %113 = vmatprep.subr.mxu0 0.0
    %114 = vmatpush1.msra.mxu0 0.0
    %115 = vmatprep.subr.mxu0 0.0
    %116 = vmatpush1.msra.mxu0 0.0
    %117 = vmatprep.subr.mxu0 0.0
    %118 = vmatpush1.msra.mxu0 0.0
    %119 = vmatprep.subr.mxu0 0.0
    %120 = vmatpush1.msra.mxu0 0.0
    %121 = vmatprep.subr.mxu0 0.0
    %122 = vmatpush1.msra.mxu0 0.0
    %123 = vmatprep.subr.mxu0 0.0
    %124 = vmatpush1.msra.mxu0 0.0
    %125 = vmatprep.subr.mxu0 0.0
    %126 = vmatpush1.msra.mxu0 0.0
    %127 = vmatprep.subr.mxu0 0.0
    %128 = vmatpush1.msra.mxu0 0.0
    %129 = vmatprep.subr.mxu0 0.0
    %130 = vmatpush1.msra.mxu0 0.0
    %131 = vmatprep.subr.mxu0 0.0
    %132 = vmatpush1.msra.mxu0 0.0
    %133 = vmatprep.subr.mxu0 0.0
    %134 = vmatpush1.msra.mxu0 0.0
    %135 = vmatprep.subr.mxu0 0.0
    %136 = vmatpush1.msra.mxu0 0.0
    %137 = vmatprep.subr.mxu0 0.0
    %138 = vmatpush1.msra.mxu0 0.0
    %139 = vmatprep.subr.mxu0 0.0
    %140 = vmatpush1.msra.mxu0 0.0
    %141 = vmatprep.subr.mxu0 0.0
    %142 = vmatpush1.msra.mxu0 0.0
    %143 = vmatprep.subr.mxu0 0.0
    %144 = vmatpush1.msra.mxu0 0.0
    %145 = vmatprep.subr.mxu0 0.0
    %146 = vmatpush1.msra.mxu0 0.0
    %147 = vmatprep.subr.mxu0 0.0
    %148 = vmatpush1.msra.mxu0 0.0
    %149 = vmatprep.subr.mxu0 0.0
    %150 = vmatpush1.msra.mxu0 0.0
    %151 = vmatprep.subr.mxu0 0.0
    %152 = vmatpush1.msra.mxu0 0.0
    %153 = vmatprep.subr.mxu0 0.0
    %154 = vmatpush1.msra.mxu0 0.0
    %155 = vmatprep.subr.mxu0 0.0
    %156 = vmatpush1.msra.mxu0 0.0
    %157 = vmatprep.subr.mxu0 0.0
    %158 = vmatpush1.msra.mxu0 0.0
    %159 = vmatprep.subr.mxu0 0.0
    %160 = vmatpush1.msra.mxu0 0.0
    %161 = vmatprep.subr.mxu0 0.0
    %162 = vmatpush1.msra.mxu0 0.0
    %163 = vmatprep.subr.mxu0 0.0
    %164 = vmatpush1.msra.mxu0 0.0
    %165 = vmatprep.mubr.f32.mxu0 0.0
    %166 = vmatmul.mubr.f32.gmra.mrb[0].mxu0 %v99
    %v167 = vpop.f32.mrb[0].mxu0
    %v168 = vadd.f32 0.0, %v167
    %v169 = vpop.f32.mrb[0].mxu0
    %170 = vdwg.mxu0
    %v171 = vmul.f32 %v168, %v168
    %173 = vrot.lane.b32.xlu0 %v171, 1
    %v174 = vpop.permute.xlu0 %173
    %v176 = vsub.f32 %v168, %v174
    %v177 = vmax.f32 %v176, 0.0
    %179 = vset.pattern.permute.xlu0 0
    %180 = vperm.xlu0 %179, %v168
    %v181 = vpop.permute.xlu0 %180
    %v183 = vsub.f32 %v83, %v181
    %v184 = vsub.f32 %v84, %v181
    %v185 = vadd.f32 %v177, 1e-05
    %v186 = vrsqrt.pop %v185
    %188 = vset.pattern.permute.xlu0 1
    %189 = vperm.xlu0 %188, %v186
    %v190 = vpop.permute.xlu0 %189
    %v192 = vmul.f32 %v183, %v190
    %v193 = vmul.f32 %v184, %v190
    %194 = vset.pattern.permute.xlu0 0
    %195 = vperm.xlu0 %194, %v80
    %v196 = vpop.permute.xlu0 %195
    %v198 = vmul.f32 %v192, %v196
    %v199 = vmul.f32 %v193, %v196
    %200 = vset.pattern.permute.xlu0 1
    %201 = vperm.xlu0 %200, %v80
    %v202 = vpop.permute.xlu0 %201
    %v204 = vadd.f32 %v198, %v202
    %v205 = vadd.f32 %v199, %v202
    %v206 = vxor.u32 %v204, 2147483648
    %v207 = vxor.u32 %v205, 2147483648
    %v208 = vmul.f32 %v206, 1.442695
    %v209 = vpow.pop %v208
    %v210 = vmul.f32 %v207, 1.442695
    %v211 = vpow.pop %v210
    %v212 = vadd.f32 %v209, 1.0
    %v213 = vadd.f32 %v211, 1.0
    %v214 = vrcp.pop %v212
    %v215 = vmul.f32 1.0, %v214
    %v216 = vrcp.pop %v213
    %v217 = vmul.f32 1.0, %v216
    %v218 = vmul.f32 %v204, %v215
    %v219 = vmul.f32 %v205, %v217
    %220 = vrot.lane.b32.xlu0 %v218, 17
    %v221 = vpop.permute.xlu0 %220
    %222 = vrot.lane.b32.xlu0 %v219, 17
    %v223 = vpop.permute.xlu0 %222
    %v224 = vlaneseq
    %v225 = vand.u32 %v224, 127
    %vm226 = vcmp.lt.s32.totalorder %v225, 17
    %v227 = vsel %vm226, %v221, %v223
    %v228 = vsel %vm226, %v223, %v221
    %v229 = vlaneseq
    %v230 = vshrl.u32 %v229, 7
    %v231 = vsub.s32 0, %v230
    %v232 = vrot.slane %v81, %v231
    %v233 = vlaneseq
    %v234 = vshrl.u32 %v233, 7
    %v235 = vsub.s32 0, %v234
    %v236 = vrot.slane %v82, %v235
    %v237 = vmul.f32 %v228, %v232
    %v238 = vmul.f32 %v227, %v236
    %239 = vrot.lane.b32.xlu0 %v218, 16
    %v240 = vpop.permute.xlu0 %239
    %241 = vrot.lane.b32.xlu0 %v219, 16
    %v242 = vpop.permute.xlu0 %241
    %vm243 = vcmp.lt.s32.totalorder %v225, 16
    %v244 = vsel %vm243, %v240, %v242
    %v245 = vsel %vm243, %v242, %v240
    %v246 = vlaneseq
    %v247 = vshrl.u32 %v246, 7
    %v248 = vsub.s32 1, %v247
    %v249 = vrot.slane %v81, %v248
    %v250 = vlaneseq
    %v251 = vshrl.u32 %v250, 7
    %v252 = vsub.s32 1, %v251
    %v253 = vrot.slane %v82, %v252
    %v254 = vmul.f32 %v245, %v249
    %v255 = vmul.f32 %v244, %v253
    %256 = vrot.lane.b32.xlu0 %v218, 15
    %v257 = vpop.permute.xlu0 %256
    %258 = vrot.lane.b32.xlu0 %v219, 15
    %v259 = vpop.permute.xlu0 %258
    %vm260 = vcmp.lt.s32.totalorder %v225, 15
    %v261 = vsel %vm260, %v257, %v259
    %v262 = vsel %vm260, %v259, %v257
    %v263 = vlaneseq
    %v264 = vshrl.u32 %v263, 7
    %v265 = vsub.s32 2, %v264
    %v266 = vrot.slane %v81, %v265
    %v267 = vlaneseq
    %v268 = vshrl.u32 %v267, 7
    %v269 = vsub.s32 2, %v268
    %v270 = vrot.slane %v82, %v269
    %v271 = vmul.f32 %v262, %v266
    %v272 = vmul.f32 %v261, %v270
    %273 = vrot.lane.b32.xlu0 %v218, 1
    %v274 = vpop.permute.xlu0 %273
    %275 = vrot.lane.b32.xlu0 %v219, 1
    %v276 = vpop.permute.xlu0 %275
    %vm277 = vcmp.lt.s32.totalorder %v225, 1
    %v278 = vsel %vm277, %v274, %v276
    %v279 = vsel %vm277, %v276, %v274
    %v280 = vlaneseq
    %v281 = vshrl.u32 %v280, 7
    %v282 = vsub.s32 3, %v281
    %v283 = vrot.slane %v81, %v282
    %v284 = vlaneseq
    %v285 = vshrl.u32 %v284, 7
    %v286 = vsub.s32 3, %v285
    %v287 = vrot.slane %v82, %v286
    %v288 = vmul.f32 %v279, %v283
    %v289 = vmul.f32 %v278, %v287
    %290 = vrot.lane.b32.xlu0 %v218, 127
    %v291 = vpop.permute.xlu0 %290
    %292 = vrot.lane.b32.xlu0 %v219, 127
    %v293 = vpop.permute.xlu0 %292
    %vm294 = vcmp.lt.s32.totalorder %v225, 127
    %v295 = vsel %vm294, %v291, %v293
    %v296 = vsel %vm294, %v293, %v291
    %v297 = vlaneseq
    %v298 = vshrl.u32 %v297, 7
    %v299 = vsub.s32 4, %v298
    %v300 = vrot.slane %v81, %v299
    %v301 = vlaneseq
    %v302 = vshrl.u32 %v301, 7
    %v303 = vsub.s32 4, %v302
    %v304 = vrot.slane %v82, %v303
    %v305 = vmul.f32 %v295, %v300
    %v306 = vmul.f32 %v296, %v304
    %307 = vrot.lane.b32.xlu0 %v218, 113
    %v308 = vpop.permute.xlu0 %307
    %309 = vrot.lane.b32.xlu0 %v219, 113
    %v310 = vpop.permute.xlu0 %309
    %vm311 = vcmp.lt.s32.totalorder %v225, 113
    %v312 = vsel %vm311, %v308, %v310
    %v313 = vsel %vm311, %v310, %v308
    %v314 = vlaneseq
    %v315 = vshrl.u32 %v314, 7
    %v316 = vsub.s32 5, %v315
    %v317 = vrot.slane %v81, %v316
    %v318 = vlaneseq
    %v319 = vshrl.u32 %v318, 7
    %v320 = vsub.s32 5, %v319
    %v321 = vrot.slane %v82, %v320
    %v322 = vmul.f32 %v312, %v317
    %v323 = vmul.f32 %v313, %v321
    %324 = vrot.lane.b32.xlu0 %v218, 112
    %v325 = vpop.permute.xlu0 %324
    %326 = vrot.lane.b32.xlu0 %v219, 112
    %v327 = vpop.permute.xlu0 %326
    %vm328 = vcmp.lt.s32.totalorder %v225, 112
    %v329 = vsel %vm328, %v325, %v327
    %v330 = vsel %vm328, %v327, %v325
    %v331 = vlaneseq
    %v332 = vshrl.u32 %v331, 7
    %v333 = vsub.s32 6, %v332
    %v334 = vrot.slane %v81, %v333
    %v335 = vlaneseq
    %v336 = vshrl.u32 %v335, 7
    %v337 = vsub.s32 6, %v336
    %v338 = vrot.slane %v82, %v337
    %v339 = vmul.f32 %v329, %v334
    %v340 = vmul.f32 %v330, %v338
    %341 = vrot.lane.b32.xlu0 %v218, 111
    %v342 = vpop.permute.xlu0 %341
    %343 = vrot.lane.b32.xlu0 %v219, 111
    %v344 = vpop.permute.xlu0 %343
    %vm345 = vcmp.lt.s32.totalorder %v225, 111
    %v346 = vsel %vm345, %v342, %v344
    %v347 = vsel %vm345, %v344, %v342
    %v348 = vlaneseq
    %v349 = vshrl.u32 %v348, 7
    %v350 = vsub.s32 7, %v349
    %v351 = vrot.slane %v81, %v350
    %v352 = vlaneseq
    %v353 = vshrl.u32 %v352, 7
    %v354 = vsub.s32 7, %v353
    %v355 = vrot.slane %v82, %v354
    %v356 = vmul.f32 %v346, %v351
    %v357 = vmul.f32 %v347, %v355
    %v358 = vld [vmem:[#allocation5] sm:$0xff]
    %v359 = vld [vmem:[#allocation5 + $0x8] sm:$0xff]
    %v360 = vxor.u32 %v358, 2147483648
    %v361 = vxor.u32 %v359, 2147483648
    %v362 = vmul.f32 %v360, 1.442695
    %v363 = vpow.pop %v362
    %v364 = vmul.f32 %v361, 1.442695
    %v365 = vpow.pop %v364
    %v366 = vadd.f32 %v363, 1.0
    %v367 = vadd.f32 %v365, 1.0
    %v368 = vrcp.pop %v366
    %v369 = vmul.f32 1.0, %v368
    %v370 = vrcp.pop %v367
    %v371 = vmul.f32 1.0, %v370
    %v372 = vmul.f32 %v358, %v369
    %v373 = vmul.f32 %v359, %v371
    %v374 = vmul.f32 %v78, %v372
    %v375 = vmul.f32 %v79, %v373
    %vm376 = vcmask 261120
    %v377 = vsel %vm376, %v374, 0.0
    %378 = vadd.xlane.f32.xlu0 %v377
    %v379 = vpop.xlane.xlu0 %378
    %v380 = vsel %vm376, %v375, 0.0
    %381 = vadd.xlane.f32.xlu0 %v380
    %v382 = vpop.xlane.xlu0 %381
    %v383 = vadd.f32 %v379, %v78
    %v384 = vadd.f32 %v382, %v79
    %386 = vset.pattern.permute.xlu0 48
    %387 = vperm.xlu0 %386, %v383
    %v388 = vpop.permute.xlu0 %387
    %391 = vset.pattern.permute.xlu0 48
    %392 = vperm.xlu0 %391, %v384
    %v393 = vpop.permute.xlu0 %392
    %vm395 = vcmask 588800
    %v397 = vsel %vm395, %v72, 0
    %v400 = vsel %vm395, %v73, 0
    %402 = vmatprep.subr.mxu0 %v238
    %403 = vmatpush1.msra.mxu0 %v237
    %404 = vmatprep.subr.mxu0 %v255
    %405 = vmatpush1.msra.mxu0 %v254
    %406 = vmatprep.subr.mxu0 %v272
    %407 = vmatpush1.msra.mxu0 %v271
    %408 = vmatprep.subr.mxu0 %v289
    %409 = vmatpush1.msra.mxu0 %v288
    %410 = vmatprep.subr.mxu0 %v219
    %411 = vmatpush1.msra.mxu0 %v218
    %412 = vmatprep.subr.mxu0 %v306
    %413 = vmatpush1.msra.mxu0 %v305
    %414 = vmatprep.subr.mxu0 %v323
    %415 = vmatpush1.msra.mxu0 %v322
    %416 = vmatprep.subr.mxu0 %v340
    %417 = vmatpush1.msra.mxu0 %v339
    %418 = vmatprep.subr.mxu0 %v357
    %419 = vmatpush1.msra.mxu0 %v356
    %420 = vmatprep.subr.mxu0 0.0
    %421 = vmatpush1.msra.mxu0 0.0
    %422 = vmatprep.subr.mxu0 0.0
    %423 = vmatpush1.msra.mxu0 0.0
    %424 = vmatprep.subr.mxu0 0.0
    %425 = vmatpush1.msra.mxu0 0.0
    %426 = vmatprep.subr.mxu0 0.0
    %427 = vmatpush1.msra.mxu0 0.0
    %428 = vmatprep.subr.mxu0 0.0
    %429 = vmatpush1.msra.mxu0 0.0
    %430 = vmatprep.subr.mxu0 0.0
    %431 = vmatpush1.msra.mxu0 0.0
    %432 = vmatprep.subr.mxu0 0.0
    %433 = vmatpush1.msra.mxu0 0.0
    %434 = vmatprep.subr.mxu0 0.0
    %435 = vmatpush1.msra.mxu0 0.0
    %436 = vmatprep.subr.mxu0 0.0
    %437 = vmatpush1.msra.mxu0 0.0
    %438 = vmatprep.subr.mxu0 0.0
    %439 = vmatpush1.msra.mxu0 0.0
    %440 = vmatprep.subr.mxu0 0.0
    %441 = vmatpush1.msra.mxu0 0.0
    %442 = vmatprep.subr.mxu0 0.0
    %443 = vmatpush1.msra.mxu0 0.0
    %444 = vmatprep.subr.mxu0 0.0
    %445 = vmatpush1.msra.mxu0 0.0
    %446 = vmatprep.subr.mxu0 0.0
    %447 = vmatpush1.msra.mxu0 0.0
    %448 = vmatprep.subr.mxu0 0.0
    %449 = vmatpush1.msra.mxu0 0.0
    %450 = vmatprep.subr.mxu0 0.0
    %451 = vmatpush1.msra.mxu0 0.0
    %452 = vmatprep.subr.mxu0 0.0
    %453 = vmatpush1.msra.mxu0 0.0
    %454 = vmatprep.subr.mxu0 0.0
    %455 = vmatpush1.msra.mxu0 0.0
    %456 = vmatprep.subr.mxu0 0.0
    %457 = vmatpush1.msra.mxu0 0.0
    %458 = vmatprep.subr.mxu0 0.0
    %459 = vmatpush1.msra.mxu0 0.0
    %460 = vmatprep.subr.mxu0 0.0
    %461 = vmatpush1.msra.mxu0 0.0
    %462 = vmatprep.subr.mxu0 0.0
    %463 = vmatpush1.msra.mxu0 0.0
    %464 = vmatprep.subr.mxu0 0.0
    %465 = vmatpush1.msra.mxu0 0.0
    %466 = vmatprep.mubr.f32.mxu0 0.0
    %467 = vmatmul.mubr.f32.gmra.mrb[0].mxu0 %v397
    %v468 = vpop.f32.mrb[0].mxu0
    %v469 = vadd.f32 %v388, %v468
    %v470 = vpop.f32.mrb[0].mxu0
    %v471 = vadd.f32 %v388, %v470
    %472 = vmatprep.mubr.f32.mxu0 0.0
    %473 = vmatmul.mubr.f32.gmra.mrb[0].mxu0 %v400
    %v474 = vpop.f32.mrb[0].mxu0
    %v475 = vadd.f32 %v393, %v474
    %v476 = vpop.f32.mrb[0].mxu0
    %v477 = vadd.f32 %v393, %v476
    %478 = vdwg.mxu0
    %v479 = vadd.f32 %v469, %v471
    %480 = vadd.xlane.f32.xlu0 %v479
    %v481 = vpop.xlane.xlu0 %480
    %v482 = vadd.f32 %v475, %v477
    %483 = vadd.xlane.f32.xlu0 %v482
    %v484 = vpop.xlane.xlu0 %483
    %v485 = vmul.f32 %v469, %v469
    %v486 = vmul.f32 %v471, %v471
    %v487 = vmul.f32 %v475, %v475
    %v488 = vmul.f32 %v477, %v477
    %v489 = vadd.f32 %v485, %v486
    %490 = vadd.xlane.f32.xlu0 %v489
    %v491 = vpop.xlane.xlu0 %490
    %v492 = vadd.f32 %v487, %v488
    %493 = vadd.xlane.f32.xlu0 %v492
    %v494 = vpop.xlane.xlu0 %493
    %v495 = vsel %vm93, %v481, %v491
    %v496 = vsel %vm93, %v484, %v494
    %499 = vrot.lane.b32.xlu0 %v78, 96
    %v500 = vpop.permute.xlu0 %499
    %501 = vrot.lane.b32.xlu0 %v79, 96
    %v502 = vpop.permute.xlu0 %501
    %vm503 = vcmask 130048
    %v504 = vsel %vm503, %v500, 0
    %v506 = vsel %vm503, %v502, 0
    %508 = vmatprep.subr.mxu0 0.0
    %509 = vmatpush1.msra.mxu0 %v495
    %510 = vmatprep.subr.mxu0 0.0
    %511 = vmatpush1.msra.mxu0 %v496
    %512 = vmatprep.subr.mxu0 0.0
    %513 = vmatpush1.msra.mxu0 0.0
    %514 = vmatprep.subr.mxu0 0.0
    %515 = vmatpush1.msra.mxu0 0.0
    %516 = vmatprep.subr.mxu0 0.0
    %517 = vmatpush1.msra.mxu0 0.0
    %518 = vmatprep.subr.mxu0 0.0
    %519 = vmatpush1.msra.mxu0 0.0
    %520 = vmatprep.subr.mxu0 0.0
    %521 = vmatpush1.msra.mxu0 0.0
    %522 = vmatprep.subr.mxu0 0.0
    %523 = vmatpush1.msra.mxu0 0.0
    %524 = vmatprep.subr.mxu0 0.0
    %525 = vmatpush1.msra.mxu0 0.0
    %526 = vmatprep.subr.mxu0 0.0
    %527 = vmatpush1.msra.mxu0 0.0
    %528 = vmatprep.subr.mxu0 0.0
    %529 = vmatpush1.msra.mxu0 0.0
    %530 = vmatprep.subr.mxu0 0.0
    %531 = vmatpush1.msra.mxu0 0.0
    %532 = vmatprep.subr.mxu0 0.0
    %533 = vmatpush1.msra.mxu0 0.0
    %534 = vmatprep.subr.mxu0 0.0
    %535 = vmatpush1.msra.mxu0 0.0
    %536 = vmatprep.subr.mxu0 0.0
    %537 = vmatpush1.msra.mxu0 0.0
    %538 = vmatprep.subr.mxu0 0.0
    %539 = vmatpush1.msra.mxu0 0.0
    %540 = vmatprep.subr.mxu0 0.0
    %541 = vmatpush1.msra.mxu0 0.0
    %542 = vmatprep.subr.mxu0 0.0
    %543 = vmatpush1.msra.mxu0 0.0
    %544 = vmatprep.subr.mxu0 0.0
    %545 = vmatpush1.msra.mxu0 0.0
    %546 = vmatprep.subr.mxu0 0.0
    %547 = vmatpush1.msra.mxu0 0.0
    %548 = vmatprep.subr.mxu0 0.0
    %549 = vmatpush1.msra.mxu0 0.0
    %550 = vmatprep.subr.mxu0 0.0
    %551 = vmatpush1.msra.mxu0 0.0
    %552 = vmatprep.subr.mxu0 0.0
    %553 = vmatpush1.msra.mxu0 0.0
    %554 = vmatprep.subr.mxu0 0.0
    %555 = vmatpush1.msra.mxu0 0.0
    %556 = vmatprep.subr.mxu0 0.0
    %557 = vmatpush1.msra.mxu0 0.0
    %558 = vmatprep.subr.mxu0 0.0
    %559 = vmatpush1.msra.mxu0 0.0
    %560 = vmatprep.subr.mxu0 0.0
    %561 = vmatpush1.msra.mxu0 0.0
    %562 = vmatprep.subr.mxu0 0.0
    %563 = vmatpush1.msra.mxu0 0.0
    %564 = vmatprep.subr.mxu0 0.0
    %565 = vmatpush1.msra.mxu0 0.0
    %566 = vmatprep.subr.mxu0 0.0
    %567 = vmatpush1.msra.mxu0 0.0
    %568 = vmatprep.subr.mxu0 0.0
    %569 = vmatpush1.msra.mxu0 0.0
    %570 = vmatprep.subr.mxu0 0.0
    %571 = vmatpush1.msra.mxu0 0.0
    %572 = vmatprep.mubr.f32.mxu0 0.0
    %573 = vmatmul.mubr.f32.gmra.mrb[0].mxu0 %v504
    %v574 = vpop.f32.mrb[0].mxu0
    %v575 = vadd.f32 0.0, %v574
    %v576 = vpop.f32.mrb[0].mxu0
    %577 = vmatprep.mubr.f32.mxu0 0.0
    %578 = vmatmul.mubr.f32.gmra.mrb[0].mxu0 %v506
    %v579 = vpop.f32.mrb[0].mxu0
    %v580 = vadd.f32 0.0, %v579
    %v581 = vpop.f32.mrb[0].mxu0
    %582 = vdwg.mxu0
    %v583 = vmul.f32 %v575, %v575
    %v584 = vmul.f32 %v580, %v580
    %587 = vrot.lane.b32.xlu0 %v583, 1
    %v588 = vpop.permute.xlu0 %587
    %589 = vrot.lane.b32.xlu0 %v584, 1
    %v590 = vpop.permute.xlu0 %589
    %v593 = vsub.f32 %v575, %v588
    %v594 = vsub.f32 %v580, %v590
    %v595 = vmax.f32 %v593, 0.0
    %v596 = vmax.f32 %v594, 0.0
    %598 = vset.pattern.permute.xlu0 0
    %599 = vperm.xlu0 %598, %v575
    %v600 = vpop.permute.xlu0 %599
    %603 = vset.pattern.permute.xlu0 0
    %604 = vperm.xlu0 %603, %v580
    %v605 = vpop.permute.xlu0 %604
    %v607 = vsub.f32 %v469, %v600
    %v608 = vsub.f32 %v471, %v600
    %v609 = vsub.f32 %v475, %v605
    %v610 = vsub.f32 %v477, %v605
    %v611 = vadd.f32 %v595, 1e-05
    %v612 = vadd.f32 %v596, 1e-05
    %v613 = vrsqrt.pop %v611
    %v614 = vrsqrt.pop %v612
    %616 = vset.pattern.permute.xlu0 1
    %617 = vperm.xlu0 %616, %v613
    %v618 = vpop.permute.xlu0 %617
    %621 = vset.pattern.permute.xlu0 1
    %622 = vperm.xlu0 %621, %v614
    %v623 = vpop.permute.xlu0 %622
    %v625 = vmul.f32 %v607, %v618
    %v626 = vmul.f32 %v608, %v618
    %v627 = vmul.f32 %v609, %v623
    %v628 = vmul.f32 %v610, %v623
    %629 = vset.pattern.permute.xlu0 49
    %630 = vperm.xlu0 %629, %v78
    %v631 = vpop.permute.xlu0 %630
    %633 = vset.pattern.permute.xlu0 49
    %634 = vperm.xlu0 %633, %v79
    %v635 = vpop.permute.xlu0 %634
    %v637 = vmul.f32 %v625, %v631
    %v638 = vmul.f32 %v626, %v631
    %v639 = vmul.f32 %v627, %v635
    %v640 = vmul.f32 %v628, %v635
    %641 = vset.pattern.permute.xlu0 50
    %642 = vperm.xlu0 %641, %v78
    %v643 = vpop.permute.xlu0 %642
    %645 = vset.pattern.permute.xlu0 50
    %646 = vperm.xlu0 %645, %v79
    %v647 = vpop.permute.xlu0 %646
    %v649 = vadd.f32 %v637, %v643
    %v650 = vadd.f32 %v638, %v643
    %v651 = vadd.f32 %v639, %v647
    %v652 = vadd.f32 %v640, %v647
    %v653 = vxor.u32 %v649, 2147483648
    %v654 = vxor.u32 %v650, 2147483648
    %v655 = vxor.u32 %v651, 2147483648
    %v656 = vxor.u32 %v652, 2147483648
    %v657 = vmul.f32 %v653, 1.442695
    %v658 = vpow.pop %v657
    %v659 = vmul.f32 %v654, 1.442695
    %v660 = vpow.pop %v659
    %v661 = vmul.f32 %v655, 1.442695
    %v662 = vpow.pop %v661
    %v663 = vmul.f32 %v656, 1.442695
    %v664 = vpow.pop %v663
    %v665 = vadd.f32 %v658, 1.0
    %v666 = vadd.f32 %v660, 1.0
    %v667 = vadd.f32 %v662, 1.0
    %v668 = vadd.f32 %v664, 1.0
    %v669 = vrcp.pop %v665
    %v670 = vmul.f32 1.0, %v669
    %v671 = vrcp.pop %v666
    %v672 = vmul.f32 1.0, %v671
    %v673 = vrcp.pop %v667
    %v674 = vmul.f32 1.0, %v673
    %v675 = vrcp.pop %v668
    %v676 = vmul.f32 1.0, %v675
    %v677 = vmul.f32 %v649, %v670
    %v678 = vmul.f32 %v650, %v672
    %v679 = vmul.f32 %v651, %v674
    %v680 = vmul.f32 %v652, %v676
    %681 = vrot.lane.b32.xlu0 %v677, 17
    %v682 = vpop.permute.xlu0 %681
    %683 = vrot.lane.b32.xlu0 %v679, 17
    %v684 = vpop.permute.xlu0 %683
    %685 = vrot.lane.b32.xlu0 %v678, 17
    %v686 = vpop.permute.xlu0 %685
    %687 = vrot.lane.b32.xlu0 %v680, 17
    %v688 = vpop.permute.xlu0 %687
    %v689 = vsel %vm226, %v682, %v686
    %v690 = vsel %vm226, %v684, %v688
    %v691 = vsel %vm226, %v686, %v682
    %v692 = vsel %vm226, %v688, %v684
    %v693 = vmul.f32 %v691, %v232
    %v694 = vmul.f32 %v689, %v236
    %v695 = vmul.f32 %v692, %v232
    %v696 = vmul.f32 %v690, %v236
    %697 = vrot.lane.b32.xlu0 %v677, 16
    %v698 = vpop.permute.xlu0 %697
    %699 = vrot.lane.b32.xlu0 %v679, 16
    %v700 = vpop.permute.xlu0 %699
    %701 = vrot.lane.b32.xlu0 %v678, 16
    %v702 = vpop.permute.xlu0 %701
    %703 = vrot.lane.b32.xlu0 %v680, 16
    %v704 = vpop.permute.xlu0 %703
    %v705 = vsel %vm243, %v698, %v702
    %v706 = vsel %vm243, %v700, %v704
    %v707 = vsel %vm243, %v702, %v698
    %v708 = vsel %vm243, %v704, %v700
    %v709 = vmul.f32 %v707, %v249
    %v710 = vmul.f32 %v705, %v253
    %v711 = vmul.f32 %v708, %v249
    %v712 = vmul.f32 %v706, %v253
    %713 = vrot.lane.b32.xlu0 %v677, 15
    %v714 = vpop.permute.xlu0 %713
    %715 = vrot.lane.b32.xlu0 %v679, 15
    %v716 = vpop.permute.xlu0 %715
    %717 = vrot.lane.b32.xlu0 %v678, 15
    %v718 = vpop.permute.xlu0 %717
    %719 = vrot.lane.b32.xlu0 %v680, 15
    %v720 = vpop.permute.xlu0 %719
    %v721 = vsel %vm260, %v714, %v718
    %v722 = vsel %vm260, %v716, %v720
    %v723 = vsel %vm260, %v718, %v714
    %v724 = vsel %vm260, %v720, %v716
    %v725 = vmul.f32 %v723, %v266
    %v726 = vmul.f32 %v721, %v270
    %v727 = vmul.f32 %v724, %v266
    %v728 = vmul.f32 %v722, %v270
    %729 = vrot.lane.b32.xlu0 %v677, 1
    %v730 = vpop.permute.xlu0 %729
    %731 = vrot.lane.b32.xlu0 %v679, 1
    %v732 = vpop.permute.xlu0 %731
    %733 = vrot.lane.b32.xlu0 %v678, 1
    %v734 = vpop.permute.xlu0 %733
    %735 = vrot.lane.b32.xlu0 %v680, 1
    %v736 = vpop.permute.xlu0 %735
    %v737 = vsel %vm277, %v730, %v734
    %v738 = vsel %vm277, %v732, %v736
    %v739 = vsel %vm277, %v734, %v730
    %v740 = vsel %vm277, %v736, %v732
    %v741 = vmul.f32 %v739, %v283
    %v742 = vmul.f32 %v737, %v287
    %v743 = vmul.f32 %v740, %v283
    %v744 = vmul.f32 %v738, %v287
    %745 = vrot.lane.b32.xlu0 %v677, 127
    %v746 = vpop.permute.xlu0 %745
    %747 = vrot.lane.b32.xlu0 %v679, 127
    %v748 = vpop.permute.xlu0 %747
    %749 = vrot.lane.b32.xlu0 %v678, 127
    %v750 = vpop.permute.xlu0 %749
    %751 = vrot.lane.b32.xlu0 %v680, 127
    %v752 = vpop.permute.xlu0 %751
    %v753 = vsel %vm294, %v746, %v750
    %v754 = vsel %vm294, %v748, %v752
    %v755 = vsel %vm294, %v750, %v746
    %v756 = vsel %vm294, %v752, %v748
    %v757 = vmul.f32 %v753, %v300
    %v758 = vmul.f32 %v755, %v304
    %v759 = vmul.f32 %v754, %v300
    %v760 = vmul.f32 %v756, %v304
    %761 = vrot.lane.b32.xlu0 %v677, 113
    %v762 = vpop.permute.xlu0 %761
    %763 = vrot.lane.b32.xlu0 %v679, 113
    %v764 = vpop.permute.xlu0 %763
    %765 = vrot.lane.b32.xlu0 %v678, 113
    %v766 = vpop.permute.xlu0 %765
    %767 = vrot.lane.b32.xlu0 %v680, 113
    %v768 = vpop.permute.xlu0 %767
    %v769 = vsel %vm311, %v762, %v766
    %v770 = vsel %vm311, %v764, %v768
    %v771 = vsel %vm311, %v766, %v762
    %v772 = vsel %vm311, %v768, %v764
    %v773 = vmul.f32 %v769, %v317
    %v774 = vmul.f32 %v771, %v321
    %v775 = vmul.f32 %v770, %v317
    %v776 = vmul.f32 %v772, %v321
    %777 = vrot.lane.b32.xlu0 %v677, 112
    %v778 = vpop.permute.xlu0 %777
    %779 = vrot.lane.b32.xlu0 %v679, 112
    %v780 = vpop.permute.xlu0 %779
    %781 = vrot.lane.b32.xlu0 %v678, 112
    %v782 = vpop.permute.xlu0 %781
    %783 = vrot.lane.b32.xlu0 %v680, 112
    %v784 = vpop.permute.xlu0 %783
    %v785 = vsel %vm328, %v778, %v782
    %v786 = vsel %vm328, %v780, %v784
    %v787 = vsel %vm328, %v782, %v778
    %v788 = vsel %vm328, %v784, %v780
    %v789 = vmul.f32 %v785, %v334
    %v790 = vmul.f32 %v787, %v338
    %v791 = vmul.f32 %v786, %v334
    %v792 = vmul.f32 %v788, %v338
    %793 = vrot.lane.b32.xlu0 %v677, 111
    %v794 = vpop.permute.xlu0 %793
    %795 = vrot.lane.b32.xlu0 %v679, 111
    %v796 = vpop.permute.xlu0 %795
    %797 = vrot.lane.b32.xlu0 %v678, 111
    %v798 = vpop.permute.xlu0 %797
    %799 = vrot.lane.b32.xlu0 %v680, 111
    %v800 = vpop.permute.xlu0 %799
    %v801 = vsel %vm345, %v794, %v798
    %v802 = vsel %vm345, %v796, %v800
    %v803 = vsel %vm345, %v798, %v794
    %v804 = vsel %vm345, %v800, %v796
    %v805 = vmul.f32 %v801, %v351
    %v806 = vmul.f32 %v803, %v355
    %v807 = vmul.f32 %v802, %v351
    %v808 = vmul.f32 %v804, %v355
    %809 = vset.pattern.permute.xlu0 51
    %810 = vperm.xlu0 %809, %v78
    %v811 = vpop.permute.xlu0 %810
    %813 = vset.pattern.permute.xlu0 51
    %814 = vperm.xlu0 %813, %v79
    %v815 = vpop.permute.xlu0 %814
    %vm817 = vcmask 195584
    %v819 = vsel %vm817, %v75, 0
    %v822 = vsel %vm817, %v77, 0
    %824 = vmatprep.subr.mxu0 %v694
    %825 = vmatpush1.msra.mxu0 %v693
    %826 = vmatprep.subr.mxu0 %v696
    %827 = vmatpush1.msra.mxu0 %v695
    %828 = vmatprep.subr.mxu0 %v710
    %829 = vmatpush1.msra.mxu0 %v709
    %830 = vmatprep.subr.mxu0 %v712
    %831 = vmatpush1.msra.mxu0 %v711
    %832 = vmatprep.subr.mxu0 %v726
    %833 = vmatpush1.msra.mxu0 %v725
    %834 = vmatprep.subr.mxu0 %v728
    %835 = vmatpush1.msra.mxu0 %v727
    %836 = vmatprep.subr.mxu0 %v742
    %837 = vmatpush1.msra.mxu0 %v741
    %838 = vmatprep.subr.mxu0 %v744
    %839 = vmatpush1.msra.mxu0 %v743
    %840 = vmatprep.subr.mxu0 %v678
    %841 = vmatpush1.msra.mxu0 %v677
    %842 = vmatprep.subr.mxu0 %v680
    %843 = vmatpush1.msra.mxu0 %v679
    %844 = vmatprep.subr.mxu0 %v758
    %845 = vmatpush1.msra.mxu0 %v757
    %846 = vmatprep.subr.mxu0 %v760
    %847 = vmatpush1.msra.mxu0 %v759
    %848 = vmatprep.subr.mxu0 %v774
    %849 = vmatpush1.msra.mxu0 %v773
    %850 = vmatprep.subr.mxu0 %v776
    %851 = vmatpush1.msra.mxu0 %v775
    %852 = vmatprep.subr.mxu0 %v790
    %853 = vmatpush1.msra.mxu0 %v789
    %854 = vmatprep.subr.mxu0 %v792
    %855 = vmatpush1.msra.mxu0 %v791
    %856 = vmatprep.subr.mxu0 %v806
    %857 = vmatpush1.msra.mxu0 %v805
    %858 = vmatprep.subr.mxu0 %v808
    %859 = vmatpush1.msra.mxu0 %v807
    %860 = vmatprep.subr.mxu0 %v84
    %861 = vmatpush1.msra.mxu0 %v83
    %862 = vmatprep.subr.mxu0 0.0
    %863 = vmatpush1.msra.mxu0 0.0
    %864 = vmatprep.subr.mxu0 0.0
    %865 = vmatpush1.msra.mxu0 0.0
    %866 = vmatprep.subr.mxu0 0.0
    %867 = vmatpush1.msra.mxu0 0.0
    %868 = vmatprep.subr.mxu0 0.0
    %869 = vmatpush1.msra.mxu0 0.0
    %870 = vmatprep.subr.mxu0 0.0
    %871 = vmatpush1.msra.mxu0 0.0
    %872 = vmatprep.subr.mxu0 0.0
    %873 = vmatpush1.msra.mxu0 0.0
    %874 = vmatprep.subr.mxu0 0.0
    %875 = vmatpush1.msra.mxu0 0.0
    %876 = vmatprep.subr.mxu0 0.0
    %877 = vmatpush1.msra.mxu0 0.0
    %878 = vmatprep.subr.mxu0 0.0
    %879 = vmatpush1.msra.mxu0 0.0
    %880 = vmatprep.subr.mxu0 0.0
    %881 = vmatpush1.msra.mxu0 0.0
    %882 = vmatprep.subr.mxu0 0.0
    %883 = vmatpush1.msra.mxu0 0.0
    %884 = vmatprep.subr.mxu0 0.0
    %885 = vmatpush1.msra.mxu0 0.0
    %886 = vmatprep.subr.mxu0 0.0
    %887 = vmatpush1.msra.mxu0 0.0
    %888 = vmatprep.mubr.f32.mxu0 %v819
    %889 = vmatmul.mubr.f32.gmra.mrb[0].mxu0 %v74
    %v890 = vpop.f32.mrb[0].mxu0
    %v891 = vadd.f32 %v811, %v890
    %v892 = vpop.f32.mrb[0].mxu0
    %v893 = vadd.f32 %v811, %v892
    %894 = vmatprep.mubr.f32.mxu0 %v822
    %895 = vmatmul.mubr.f32.gmra.mrb[0].mxu0 %v76
    %v896 = vpop.f32.mrb[0].mxu0
    %v897 = vadd.f32 %v815, %v896
    %v898 = vpop.f32.mrb[0].mxu0
    %v899 = vadd.f32 %v815, %v898
    %900 = vdwg.mxu0
    %901 = vst [vmem:[#allocation10] sm:$0xff] %v891
    %902 = vst [vmem:[#allocation10 + $0x8] sm:$0xff] %v893
    %903 = vst [vmem:[#allocation10 + $0x10] sm:$0xff] %v897
    %904 = vst [vmem:[#allocation10 + $0x18] sm:$0xff] %v899
    // Predicated region
    $region38: #{tpu_custom_call.1} parent=1 // pred_check
      _
    $region39: #{tpu_custom_call.1} parent=1 // pred_check_branch
      %906 = sbr.rel (0) target = $region41
    $region40: #{tpu_custom_call.1} parent=1 // pred_region
      %s908 = ssub.s32 512, 512
      %909 = vsyncadd [#allocation4], %s908
      %s910 = sshll.u32 [#allocation10], 4
      %s911 = int_to_ptr.vmem [resolvable:$true] %s910
      %916 = dma.vmem_to_hbm [thread:$0]  %s911, 512, %s5, [#allocation4], 256, 256, 16
    $region41: #{tpu_custom_call.1} parent=1 // pred_fallthru
      _
    // Predicated region
    $region42: #{tpu_custom_call.1} parent=1 // pred_check
      _
    $region43: #{tpu_custom_call.1} parent=1 // pred_check_branch
      %918 = sbr.rel (0) target = $region45
    $region44: #{tpu_custom_call.1} parent=1 // pred_region
      %919 = dma.done [#allocation4], 512
    $region45: #{tpu_custom_call.1} parent=1 // pred_fallthru
      _
    %920 = vsyncpa [#allocation3], 1
    %921 = vsyncpa [#allocation6], 1
    %922 = vsyncpa [#allocation9], 1
    %923 = vsyncpa [#allocation4], 1

</llo_original>
